<compile_context>
chip_gen: v7x
topology: tpu7x:2x2x1
jax: 0.10.0
libtpu: 0.0.40
codegen_flags: <defaults>
</compile_context>

<pallas_src>
import functools

import jax
import jax.numpy as jnp
from jax.experimental import pallas as pl
from jax.experimental.pallas import tpu as pltpu


def _avgpool_linear_kernel(x_ref, w_ref, b_ref, o_ref):
    # x_ref: (BM, C, L), w_ref: (N, L) pre-scaled by 1/C, b_ref: (1, N), o_ref: (BM, N)
    x = x_ref[...]
    # Channel sum (mean's 1/C is folded into w in the wrapper).
    s = jnp.sum(x, axis=1)                                           # (BM, L), input dtype
    # Linear: contract the L dims of (BM, L) and (N, L) -> (BM, N); f32 MXU accumulation.
    y = jax.lax.dot_general(
        s, w_ref[...],
        dimension_numbers=(((1,), (1,)), ((), ())),
        preferred_element_type=jnp.float32,
    )                                                                # (BM, N) f32
    o_ref[...] = (y + b_ref[...]).astype(o_ref.dtype)
    # TODO(synk): Dropout(p=0.3) omitted (identity at inference time).


@functools.partial(jax.jit, static_argnames=("block_b",))
def avgpool_model(x, w, b, *, block_b=256):
    """x: (B, C, L), w: (N, L), b: (N,) -> (B, N) float32."""
    B, C, L = x.shape
    N = w.shape[0]

    # Fold the 1/C of AdaptiveAvgPool1d's mean into the weights (host-side, once),
    # and match the weight dtype to the input so bf16 inputs stay bf16 end-to-end.
    w_scaled = (w.astype(jnp.float32) / jnp.float32(C)).astype(x.dtype)
    b2d = b.astype(jnp.float32).reshape(1, N)

    # Batch tile sized conservatively for v7x's smaller VMEM (double-buffered
    # x tile + resident w/b/out stay well under the scoped limit at these C/L).
    bm = min(B, block_b)
    grid = (pl.cdiv(B, bm),)

    return pl.pallas_call(
        _avgpool_linear_kernel,
        out_shape=jax.ShapeDtypeStruct((B, N), jnp.float32),
        grid=grid,
        in_specs=[
            pl.BlockSpec((bm, C, L), lambda i: (i, 0, 0)),   # batch-tiled input
            pl.BlockSpec((N, L), lambda i: (0, 0)),          # weights: VMEM-resident
            pl.BlockSpec((1, N), lambda i: (0, 0)),          # bias:    VMEM-resident
        ],
        out_specs=pl.BlockSpec((bm, N), lambda i: (i, 0)),
        compiler_params=pltpu.CompilerParams(
            dimension_semantics=("parallel",),
        ),
    )(x, w_scaled, b2d)


if __name__ == "__main__":
    # Small shapes consistent with the module: input_size (=L) = 32, num_classes = 31.
    B, C, L = 4, 4, 32
    num_classes = 31

    key = jax.random.PRNGKey(0)
    kx, kw, kb = jax.random.split(key, 3)

    x = jax.random.normal(kx, (B, C, L), dtype=jnp.float32)

    # Deterministic Linear init (PyTorch-style uniform(-1/sqrt(L), 1/sqrt(L))).
    bound = 1.0 / (L ** 0.5)
    w = jax.random.uniform(kw, (num_classes, L), jnp.float32, -bound, bound)
    b = jax.random.uniform(kb, (num_classes,), jnp.float32, -bound, bound)

    out = jax.block_until_ready(avgpool_model(x, w, b))

    # Pure-JAX reference check (mean over C, then Linear).
    ref = jnp.mean(x, axis=1) @ w.T + b
    assert out.shape == (B, num_classes)
    assert jnp.allclose(out, ref, atol=1e-5, rtol=1e-5)

    print("KERNEL_OK")
</pallas_src>

<mosaic_0001>
module attributes {stable_mosaic.version = 11 : i64} {
  func.func @_avgpool_linear_kernel(%arg0: i32, %arg1: memref<4x4x32xf32, #tpu.memory_space<vmem>>, %arg2: memref<31x32xf32, #tpu.memory_space<vmem>>, %arg3: memref<1x31xf32, #tpu.memory_space<vmem>>, %arg4: memref<4x31xf32, #tpu.memory_space<vmem>>) attributes {dimension_semantics = [#tpu.dimension_semantics<parallel>], iteration_bounds = array<i64: 1>, scalar_prefetch = 0 : i64, scratch_operands = 0 : i64, tpu.core_type = #tpu.core_type<tc>, window_params = [{transform_indices = @transform_0, window_bounds = array<i64: 4, 4, 32>}, {pipeline_mode = #tpu.pipeline_mode<synchronous>, transform_indices = @transform_1, window_bounds = array<i64: 31, 32>}, {pipeline_mode = #tpu.pipeline_mode<synchronous>, transform_indices = @transform_2, window_bounds = array<i64: 1, 31>}, {transform_indices = @transform_3, window_bounds = array<i64: 4, 31>}]} {
    %c0 = arith.constant 0 : index
    %c0_0 = arith.constant 0 : index
    %c0_1 = arith.constant 0 : index
    %0 = vector.load %arg1[%c0, %c0_0, %c0_1] : memref<4x4x32xf32, #tpu.memory_space<vmem>>, vector<4x4x32xf32>
    %cst = arith.constant dense<0.000000e+00> : vector<4x32xf32>
    %1 = vector.multi_reduction <add>, %0, %cst [1] : vector<4x4x32xf32> to vector<4x32xf32>
    %c0_2 = arith.constant 0 : index
    %c0_3 = arith.constant 0 : index
    %2 = vector.load %arg2[%c0_2, %c0_3] : memref<31x32xf32, #tpu.memory_space<vmem>>, vector<31x32xf32>
    %cst_4 = arith.constant dense<0.000000e+00> : vector<4x31xf32>
    %3 = tpu.matmul %1, %2, %cst_4 {dimension_numbers = #tpu.dot_dimension_numbers<[1], [1], [0], [0], [0, 0, 1, 0], [], []>} : vector<4x32xf32>, vector<31x32xf32>, vector<4x31xf32> -> vector<4x31xf32>
    %c0_5 = arith.constant 0 : index
    %c0_6 = arith.constant 0 : index
    %4 = vector.load %arg3[%c0_5, %c0_6] : memref<1x31xf32, #tpu.memory_space<vmem>>, vector<1x31xf32>
    %5 = vector.broadcast %4 : vector<1x31xf32> to vector<4x31xf32>
    %6 = arith.addf %3, %5 : vector<4x31xf32>
    %c0_7 = arith.constant 0 : index
    %c0_8 = arith.constant 0 : index
    %7 = vector.load %arg4[%c0_7, %c0_8] : memref<4x31xf32, #tpu.memory_space<vmem>>, vector<4x31xf32>
    tpu.vector_store %arg4[%c0_7, %c0_8], %6 {strides = array<i32>} : memref<4x31xf32, #tpu.memory_space<vmem>>, vector<4x31xf32>,
    return
  }
  func.func @transform_0(%arg0: i32) -> (i32, i32, i32) {
    %c0_i32 = arith.constant 0 : i32
    %c0_i32_0 = arith.constant 0 : i32
    %c0_i32_1 = arith.constant 0 : i32
    return %arg0, %c0_i32, %c0_i32_0 : i32, i32, i32
  }
  func.func @transform_1(%arg0: i32) -> (i32, i32) {
    %c0_i32 = arith.constant 0 : i32
    %c0_i32_0 = arith.constant 0 : i32
    %c0_i32_1 = arith.constant 0 : i32
    return %c0_i32, %c0_i32_0 : i32, i32
  }
  func.func @transform_2(%arg0: i32) -> (i32, i32) {
    %c0_i32 = arith.constant 0 : i32
    %c0_i32_0 = arith.constant 0 : i32
    %c0_i32_1 = arith.constant 0 : i32
    return %c0_i32, %c0_i32_0 : i32, i32
  }
  func.func @transform_3(%arg0: i32) -> (i32, i32) {
    %c0_i32 = arith.constant 0 : i32
    %c0_i32_0 = arith.constant 0 : i32
    return %arg0, %c0_i32 : i32, i32
  }
}

</mosaic_0001>

<llo_original>
// kernel: avgpool_model.1
$region0: #{avgpool_model.1}
  #allocation0 [shape = 'u32[]', space=smem, size = 0x4, offset = 0x4, fixed_abs, tag = 'smem constant byte address 0x4 - core index']
  #allocation1 [shape = 'u32[144,128]{1,0:T(1,128)}', space=vmem, size = 0x12000, scoped, tag = 'internal scratch']
  %s0 = inlined_call_operand.vmem [shape: f32[4,4,32], index: 0, kind: input, shape index: {}]
  %s1 = inlined_call_operand.vmem [shape: f32[31,32], index: 1, kind: input, shape index: {}]
  %s2 = inlined_call_operand.vmem [shape: f32[1,31], index: 2, kind: input, shape index: {}]
  %s3 = inlined_call_operand.hbm [shape: f32[4,31], index: 3, kind: output, shape index: {}]
  %s4 = sld [smem:[#allocation0]]
  $region22: #{avgpool_model.1} parent=0
    _
  %s6 = ssub.s32 1, %s4
  %s7 = scalar_select 0, %s6, %s4
  $region1: #{avgpool_model.1} parent=0
    #allocation2 [shape = 'u8[2048]{0}', space=vmem, size = 0x800, scoped, tag = 'output window, operand 0, single buffered']
    #allocation3 [shape = 's32[1]{0}', space=sflag, size = 0x4, scoped, tag = 'scoped memory for avgpool_model.1']
    %8 = vsyncpa [#allocation3], 0
    // Predicated region
    $region2: #{avgpool_model.1} parent=1 // pred_check
      _
    $region3: #{avgpool_model.1} parent=1 // pred_check_branch
      %10 = sbr.rel (0) target = $region5
    $region4: #{avgpool_model.1} parent=1 // pred_region
      _
    $region5: #{avgpool_model.1} parent=1 // pred_fallthru
      _
    // Predicated region
    $region6: #{avgpool_model.1} parent=1 // pred_check
      _
    $region7: #{avgpool_model.1} parent=1 // pred_check_branch
      %12 = sbr.rel (0) target = $region9
    $region8: #{avgpool_model.1} parent=1 // pred_region
      _
    $region9: #{avgpool_model.1} parent=1 // pred_fallthru
      _
    // Predicated region
    $region10: #{avgpool_model.1} parent=1 // pred_check
      _
    $region11: #{avgpool_model.1} parent=1 // pred_check_branch
      %14 = sbr.rel (0) target = $region13
    $region12: #{avgpool_model.1} parent=1 // pred_region
      _
    $region13: #{avgpool_model.1} parent=1 // pred_fallthru
      _
    %v15 = vld [vmem:[%s0] sm:$0xf]
    %v16 = vld [vmem:[%s0 + $0x4] sm:$0xf]
    %v17 = vld [vmem:[%s0 + $0x8] sm:$0xf]
    %v18 = vld [vmem:[%s0 + $0xc] sm:$0xf]
    %vm19 = vcmask 257024
    %v20 = vsel %vm19, %v15, 0.0
    %v21 = vrot.slane %v20, 4
    %v22 = vadd.f32 %v20, %v21
    %v23 = vrot.slane %v22, 2
    %v24 = vadd.f32 %v22, %v23
    %v25 = vrot.slane %v24, 1
    %v26 = vadd.f32 %v24, %v25
    %v27 = vsel %vm19, %v16, 0.0
    %v28 = vrot.slane %v27, 4
    %v29 = vadd.f32 %v27, %v28
    %v30 = vrot.slane %v29, 2
    %v31 = vadd.f32 %v29, %v30
    %v32 = vrot.slane %v31, 1
    %v33 = vadd.f32 %v31, %v32
    %v34 = vsel %vm19, %v17, 0.0
    %v35 = vrot.slane %v34, 4
    %v36 = vadd.f32 %v34, %v35
    %v37 = vrot.slane %v36, 2
    %v38 = vadd.f32 %v36, %v37
    %v39 = vrot.slane %v38, 1
    %v40 = vadd.f32 %v38, %v39
    %v41 = vsel %vm19, %v18, 0.0
    %v42 = vrot.slane %v41, 4
    %v43 = vadd.f32 %v41, %v42
    %v44 = vrot.slane %v43, 2
    %v45 = vadd.f32 %v43, %v44
    %v46 = vrot.slane %v45, 1
    %v47 = vadd.f32 %v45, %v46
    %v48 = vld [vmem:[%s1] sm:$0xff]
    %v49 = vld [vmem:[%s1 + $0x8] sm:$0xff]
    %v50 = vld [vmem:[%s1 + $0x10] sm:$0xff]
    %v51 = vld [vmem:[%s1 + $0x18] sm:$0x7f]
    %v52 = vld [vmem:[%s2] sm:$0x1]
    %v54 = vlaneseq
    %v55 = vshrl.u32 %v54, 7
    %v56 = vsub.s32 0, %v55
    %v57 = vrot.slane %v52, %v56
    %vm63 = vcmask 1041409
    %v64 = vsel %vm63, %v33, %v26
    %vm65 = vcmask 1042434
    %v66 = vsel %vm65, %v40, %v64
    %vm67 = vcmask 1043459
    %v68 = vsel %vm67, %v47, %v66
    %vm69 = vcmask 261120
    %v70 = vsel %vm69, %v68, 0
    %v73 = vsel %vm69, %v48, 0
    %v76 = vsel %vm69, %v49, 0
    %v79 = vsel %vm69, %v50, 0
    %v82 = vsel %vm69, %v51, 0
    %84 = vmatprep.subr.mxu0 0.0
    %85 = vmatpush1.xpose.msra.mxu0 %v73
    %86 = vmatprep.subr.mxu0 0.0
    %87 = vmatpush1.xpose.msra.mxu0 %v76
    %88 = vmatprep.subr.mxu0 0.0
    %89 = vmatpush1.xpose.msra.mxu0 %v79
    %90 = vmatprep.subr.mxu0 0.0
    %91 = vmatpush1.xpose.msra.mxu0 %v82
    %92 = vmatprep.subr.mxu0 0.0
    %93 = vmatpush1.xpose.msra.mxu0 0.0
    %94 = vmatprep.subr.mxu0 0.0
    %95 = vmatpush1.xpose.msra.mxu0 0.0
    %96 = vmatprep.subr.mxu0 0.0
    %97 = vmatpush1.xpose.msra.mxu0 0.0
    %98 = vmatprep.subr.mxu0 0.0
    %99 = vmatpush1.xpose.msra.mxu0 0.0
    %100 = vmatprep.subr.mxu0 0.0
    %101 = vmatpush1.xpose.msra.mxu0 0.0
    %102 = vmatprep.subr.mxu0 0.0
    %103 = vmatpush1.xpose.msra.mxu0 0.0
    %104 = vmatprep.subr.mxu0 0.0
    %105 = vmatpush1.xpose.msra.mxu0 0.0
    %106 = vmatprep.subr.mxu0 0.0
    %107 = vmatpush1.xpose.msra.mxu0 0.0
    %108 = vmatprep.subr.mxu0 0.0
    %109 = vmatpush1.xpose.msra.mxu0 0.0
    %110 = vmatprep.subr.mxu0 0.0
    %111 = vmatpush1.xpose.msra.mxu0 0.0
    %112 = vmatprep.subr.mxu0 0.0
    %113 = vmatpush1.xpose.msra.mxu0 0.0
    %114 = vmatprep.subr.mxu0 0.0
    %115 = vmatpush1.xpose.msra.mxu0 0.0
    %116 = vmatprep.subr.mxu0 0.0
    %117 = vmatpush1.xpose.msra.mxu0 0.0
    %118 = vmatprep.subr.mxu0 0.0
    %119 = vmatpush1.xpose.msra.mxu0 0.0
    %120 = vmatprep.subr.mxu0 0.0
    %121 = vmatpush1.xpose.msra.mxu0 0.0
    %122 = vmatprep.subr.mxu0 0.0
    %123 = vmatpush1.xpose.msra.mxu0 0.0
    %124 = vmatprep.subr.mxu0 0.0
    %125 = vmatpush1.xpose.msra.mxu0 0.0
    %126 = vmatprep.subr.mxu0 0.0
    %127 = vmatpush1.xpose.msra.mxu0 0.0
    %128 = vmatprep.subr.mxu0 0.0
    %129 = vmatpush1.xpose.msra.mxu0 0.0
    %130 = vmatprep.subr.mxu0 0.0
    %131 = vmatpush1.xpose.msra.mxu0 0.0
    %132 = vmatprep.subr.mxu0 0.0
    %133 = vmatpush1.xpose.msra.mxu0 0.0
    %134 = vmatprep.subr.mxu0 0.0
    %135 = vmatpush1.xpose.msra.mxu0 0.0
    %136 = vmatprep.subr.mxu0 0.0
    %137 = vmatpush1.xpose.msra.mxu0 0.0
    %138 = vmatprep.subr.mxu0 0.0
    %139 = vmatpush1.xpose.msra.mxu0 0.0
    %140 = vmatprep.subr.mxu0 0.0
    %141 = vmatpush1.xpose.msra.mxu0 0.0
    %142 = vmatprep.subr.mxu0 0.0
    %143 = vmatpush1.xpose.msra.mxu0 0.0
    %144 = vmatprep.subr.mxu0 0.0
    %145 = vmatpush1.xpose.msra.mxu0 0.0
    %146 = vmatprep.subr.mxu0 0.0
    %147 = vmatpush1.xpose.msra.mxu0 0.0
    %148 = vmatprep.mubr.f32.mxu0 0.0
    %149 = vmatmul.mubr.f32.gmra.mrb[0].mxu0 %v70
    %v150 = vpop.f32.mrb[0].mxu0
    %v151 = vadd.f32 %v57, %v150
    %v152 = vpop.f32.mrb[0].mxu0
    %153 = vdwg.mxu0
    %vm154 = vcmask 248832
    %155 = vst.msk [vmem:[#allocation2] sm:$0xf] %vm154, %v151
    // Predicated region
    $region14: #{avgpool_model.1} parent=1 // pred_check
      _
    $region15: #{avgpool_model.1} parent=1 // pred_check_branch
      %157 = sbr.rel (0) target = $region17
    $region16: #{avgpool_model.1} parent=1 // pred_region
      %s159 = ssub.s32 64, 64
      %160 = vsyncadd [#allocation3], %s159
      %s162 = sshll.u32 [#allocation2], 4
      %s163 = int_to_ptr.vmem [resolvable:$true] %s162
      %165 = dma.vmem_to_hbm [thread:$0]  %s163, 64, %s3, [#allocation3]
    $region17: #{avgpool_model.1} parent=1 // pred_fallthru
      _
    // Predicated region
    $region18: #{avgpool_model.1} parent=1 // pred_check
      _
    $region19: #{avgpool_model.1} parent=1 // pred_check_branch
      %167 = sbr.rel (0) target = $region21
    $region20: #{avgpool_model.1} parent=1 // pred_region
      %168 = dma.done [#allocation3], 64
    $region21: #{avgpool_model.1} parent=1 // pred_fallthru
      _
    %169 = vsyncpa [#allocation3], 1

</llo_original>
